<compile_context>
chip_gen: v7x
topology: tpu7x:2x2x1
jax: 0.10.0
libtpu: 0.0.40
codegen_flags: <defaults>
</compile_context>

<pallas_src>
import functools
import math

import jax
import jax.numpy as jnp
from jax.experimental import pallas as pl
from jax.experimental.pallas import tpu as pltpu


def _label_smoothing_kernel(x_ref, tgt_ref, o_ref, acc_ref, *,
                            padding_idx, confidence, smooth_val, ent_const,
                            block_vocab, pad_tile_idx, pad_chunk_start,
                            pad_lane_off):
    j = pl.program_id(1)
    nj = pl.num_programs(1)

    @pl.when(j == 0)
    def _init():
        acc_ref[...] = jnp.zeros_like(acc_ref)

    x = x_ref[...].astype(jnp.float32)          # (TN, TV) log-probs, f32
    tgt = tgt_ref[...]                          # (TN, 1) int32
    tn, tv = x.shape

    # --- hot loop: pure VPU, 4 ops / element ---------------------------------
    col_local = jax.lax.broadcasted_iota(jnp.int32, (tn, tv), 1)
    tgt_local = tgt - j * block_vocab           # (TN, 1); lane-broadcast in the cmp
    w = jnp.where(col_local == tgt_local,
                  jnp.float32(confidence), jnp.float32(smooth_val))
    acc_ref[...] = acc_ref[...] + w * x

    # --- true_dist[:, padding_idx] = 0: undo that one column's contribution ---
    # Runs only on the vocab tile containing padding_idx; RMW of one lane-aligned
    # 128-wide accumulator chunk. (Invalid rows are masked at finalize anyway.)
    @pl.when(j == pad_tile_idx)
    def _fix_pad_column():
        lane = jax.lax.broadcasted_iota(jnp.int32, (tn, 128), 1)
        xc = x[:, pad_chunk_start:pad_chunk_start + 128]
        corr = jnp.where(lane == pad_lane_off,
                         jnp.float32(smooth_val), jnp.float32(0.0)) * xc
        acc_ref[:, pad_chunk_start:pad_chunk_start + 128] = (
            acc_ref[:, pad_chunk_start:pad_chunk_start + 128] - corr)

    # --- finalize: row-validity mask + cross-lane reduce, once per token tile --
    @pl.when(j == nj - 1)
    def _finalize():
        row_valid = tgt != padding_idx                              # (TN, 1)
        row_sums = jnp.sum(acc_ref[...], axis=1, keepdims=True)     # (TN, 1)
        masked = jnp.where(row_valid, row_sums, jnp.float32(0.0))
        n_valid = jnp.sum(row_valid.astype(jnp.float32))
        total = jnp.float32(ent_const) * n_valid - jnp.sum(masked)
        # Lane-dense, unmasked store; wrapper reads [:, 0, 0].
        o_ref[...] = jnp.broadcast_to(total, o_ref.shape)


def _round_up(a, b):
    return (a + b - 1) // b * b


def label_smoothing_loss(x, target, *, size, padding_idx, smoothing,
                         block_tokens=256, block_vocab=2048):
    """Pallas equivalent of LabelSmoothing(size, padding_idx, smoothing)(x, target).

    x: (N, V) float log-probabilities (f32 or bf16), target: (N,) int class indices.
    """
    n, v = x.shape
    assert v == size, "x.shape[1] must equal size"

    confidence = 1.0 - smoothing
    smooth_val = smoothing / (size - 2) if size > 2 else 0.0
    ent_const = 0.0
    if confidence > 0.0:
        ent_const += confidence * math.log(confidence)
    if smooth_val > 0.0:
        ent_const += (size - 2) * smooth_val * math.log(smooth_val)

    # Tile sizes: sublane-aligned tokens, lane-aligned vocab.
    tn = _round_up(min(block_tokens, n), 16)
    tv = _round_up(min(block_vocab, v), 128)
    n_pad = _round_up(n, tn)
    v_pad = _round_up(v, tv)

    target = target.astype(jnp.int32)
    if n_pad != n or v_pad != v:
        # Padded rows get target == padding_idx (masked out at finalize);
        # padded columns have x == 0, so their contribution is exactly 0.
        x = jnp.pad(x, ((0, n_pad - n), (0, v_pad - v)))
        target = jnp.pad(target, (0, n_pad - n), constant_values=padding_idx)
    tgt2d = target.reshape(n_pad, 1)

    grid = (n_pad // tn, v_pad // tv)

    pad_local = padding_idx % tv
    kernel = functools.partial(
        _label_smoothing_kernel,
        padding_idx=padding_idx,
        confidence=confidence,
        smooth_val=smooth_val,
        ent_const=ent_const,
        block_vocab=tv,
        pad_tile_idx=padding_idx // tv,
        pad_chunk_start=(pad_local // 128) * 128,
        pad_lane_off=pad_local % 128,
    )

    partials = pl.pallas_call(
        kernel,
        out_shape=jax.ShapeDtypeStruct((grid[0], 8, 128), jnp.float32),
        grid_spec=pltpu.PrefetchScalarGridSpec(
            num_scalar_prefetch=0,
            grid=grid,
            in_specs=[
                pl.BlockSpec((tn, tv), lambda i, j: (i, j)),   # x tiles (pipelined)
                pl.BlockSpec((tn, 1), lambda i, j: (i, 0)),    # targets: constant over j
            ],
            out_specs=pl.BlockSpec((1, 8, 128), lambda i, j: (i, 0, 0)),
            scratch_shapes=[pltpu.VMEM((tn, tv), jnp.float32)],   # f32 accumulator
        ),
        compiler_params=pltpu.CompilerParams(
            dimension_semantics=("parallel", "arbitrary")),
    )(x, tgt2d)

    return jnp.sum(partials[:, 0, 0])


def _reference_loss(x, target, *, size, padding_idx, smoothing):
    """Pure-JAX reference mirroring the PyTorch forward (for a sanity check)."""
    n, v = x.shape
    confidence = 1.0 - smoothing
    true_dist = jnp.full((n, v), smoothing / (size - 2), dtype=jnp.float32)
    true_dist = true_dist.at[jnp.arange(n), target].set(confidence)
    true_dist = true_dist.at[:, padding_idx].set(0.0)
    true_dist = jnp.where((target == padding_idx)[:, None], 0.0, true_dist)
    safe_t = jnp.where(true_dist > 0, true_dist, 1.0)
    kl = jnp.where(true_dist > 0, true_dist * (jnp.log(safe_t) - x), 0.0)
    return jnp.sum(kl)


if __name__ == "__main__":
    key = jax.random.PRNGKey(0)

    # --- Test 1: small shapes, padding_idx = 0, non-tile-multiple token count ---
    SIZE, PADDING_IDX, SMOOTHING, N_TOKENS = 512, 0, 0.1, 50
    k_logits, k_tgt, key = jax.random.split(key, 3)
    logits = jax.random.normal(k_logits, (N_TOKENS, SIZE), dtype=jnp.float32)
    x = jax.nn.log_softmax(logits, axis=-1)          # x is expected to be log-probs
    target = jax.random.randint(k_tgt, (N_TOKENS,), 1, SIZE, dtype=jnp.int32)
    target = target.at[3].set(PADDING_IDX)           # include padding tokens
    target = target.at[7].set(PADDING_IDX)

    loss = label_smoothing_loss(
        x, target, size=SIZE, padding_idx=PADDING_IDX, smoothing=SMOOTHING,
        block_tokens=32, block_vocab=256,            # 2x2 grid for the test
    )
    jax.block_until_ready(loss)
    ref = _reference_loss(x, target, size=SIZE, padding_idx=PADDING_IDX,
                          smoothing=SMOOTHING)
    assert jnp.allclose(loss, ref, rtol=1e-4, atol=1e-2), (loss, ref)

    # --- Test 2: padding_idx inside a non-zero vocab tile / non-zero lane offset ---
    SIZE2, PADDING_IDX2, SMOOTHING2, N_TOKENS2 = 384, 130, 0.2, 40
    k_logits2, k_tgt2, key = jax.random.split(key, 3)
    logits2 = jax.random.normal(k_logits2, (N_TOKENS2, SIZE2), dtype=jnp.float32)
    x2 = jax.nn.log_softmax(logits2, axis=-1)
    target2 = jax.random.randint(k_tgt2, (N_TOKENS2,), 0, SIZE2, dtype=jnp.int32)
    target2 = target2.at[5].set(PADDING_IDX2)

    loss2 = label_smoothing_loss(
        x2, target2, size=SIZE2, padding_idx=PADDING_IDX2, smoothing=SMOOTHING2,
        block_tokens=16, block_vocab=128,            # 3 vocab tiles; pad tile = 1
    )
    jax.block_until_ready(loss2)
    ref2 = _reference_loss(x2, target2, size=SIZE2, padding_idx=PADDING_IDX2,
                           smoothing=SMOOTHING2)
    assert jnp.allclose(loss2, ref2, rtol=1e-4, atol=1e-2), (loss2, ref2)

    # TODO(synk): the PyTorch module also caches `self.true_dist` as a side effect;
    # only the loss value is produced here.
    print("KERNEL_OK")
</pallas_src>

<mosaic_0001>
module attributes {stable_mosaic.version = 11 : i64} {
  func.func @_label_smoothing_kernel(%arg0: i32, %arg1: i32, %arg2: memref<32x256xf32, #tpu.memory_space<vmem>>, %arg3: memref<32x1xi32, #tpu.memory_space<vmem>>, %arg4: memref<1x8x128xf32, #tpu.memory_space<vmem>>, %arg5: memref<32x256xf32, #tpu.memory_space<vmem>>) attributes {dimension_semantics = [#tpu.dimension_semantics<parallel>, #tpu.dimension_semantics<arbitrary>], iteration_bounds = array<i64: 2, 2>, scalar_prefetch = 0 : i64, scratch_operands = 1 : i64, tpu.core_type = #tpu.core_type<tc>, window_params = [{transform_indices = @transform_0, window_bounds = array<i64: 32, 256>}, {transform_indices = @transform_1, window_bounds = array<i64: 32, 1>}, {transform_indices = @transform_2, window_bounds = array<i64: 1, 8, 128>}]} {
    %c0_i32 = arith.constant 0 : i32
    %0 = arith.cmpi eq, %arg1, %c0_i32 : i32
    %1 = arith.extui %0 : i1 to i32
    %c0_i32_0 = arith.constant 0 : i32
    %2 = arith.cmpi ne, %1, %c0_i32_0 : i32
    scf.if %2 {
      %cst_12 = arith.constant 0.000000e+00 : f32
      %24 = vector.broadcast %cst_12 : f32 to vector<32x256xf32>
      %c0_13 = arith.constant 0 : index
      %c0_14 = arith.constant 0 : index
      %25 = vector.load %arg5[%c0_13, %c0_14] : memref<32x256xf32, #tpu.memory_space<vmem>>, vector<32x256xf32>
      tpu.vector_store %arg5[%c0_13, %c0_14], %24 {strides = array<i32>} : memref<32x256xf32, #tpu.memory_space<vmem>>, vector<32x256xf32>,
    } else {
    }
    %c0 = arith.constant 0 : index
    %c0_1 = arith.constant 0 : index
    %3 = vector.load %arg2[%c0, %c0_1] : memref<32x256xf32, #tpu.memory_space<vmem>>, vector<32x256xf32>
    %c0_2 = arith.constant 0 : index
    %c0_3 = arith.constant 0 : index
    %4 = vector.load %arg3[%c0_2, %c0_3] : memref<32x1xi32, #tpu.memory_space<vmem>>, vector<32x1xi32>
    %5 = tpu.iota {dimensions = array<i32: 1>} : vector<32x256xi32>
    %c256_i32 = arith.constant 256 : i32
    %6 = arith.muli %arg1, %c256_i32 : i32
    %7 = vector.broadcast %6 : i32 to vector<32x1xi32>
    %8 = arith.subi %4, %7 : vector<32x1xi32>
    %9 = vector.broadcast %8 : vector<32x1xi32> to vector<32x256xi32>
    %10 = arith.cmpi eq, %5, %9 : vector<32x256xi32>
    %cst = arith.constant 0.899999976 : f32
    %cst_4 = arith.constant 1.96078428E-4 : f32
    %11 = vector.broadcast %cst : f32 to vector<32x256xf32>
    %12 = vector.broadcast %cst_4 : f32 to vector<32x256xf32>
    %13 = arith.select %10, %11, %12 : vector<32x256xi1>, vector<32x256xf32>
    %c0_5 = arith.constant 0 : index
    %c0_6 = arith.constant 0 : index
    %14 = vector.load %arg5[%c0_5, %c0_6] : memref<32x256xf32, #tpu.memory_space<vmem>>, vector<32x256xf32>
    %15 = arith.mulf %13, %3 : vector<32x256xf32>
    %16 = arith.addf %14, %15 : vector<32x256xf32>
    %c0_7 = arith.constant 0 : index
    %c0_8 = arith.constant 0 : index
    %17 = vector.load %arg5[%c0_7, %c0_8] : memref<32x256xf32, #tpu.memory_space<vmem>>, vector<32x256xf32>
    tpu.vector_store %arg5[%c0_7, %c0_8], %16 {strides = array<i32>} : memref<32x256xf32, #tpu.memory_space<vmem>>, vector<32x256xf32>,
    %c0_i32_9 = arith.constant 0 : i32
    %18 = arith.cmpi eq, %arg1, %c0_i32_9 : i32
    %19 = arith.extui %18 : i1 to i32
    %c0_i32_10 = arith.constant 0 : i32
    %20 = arith.cmpi ne, %19, %c0_i32_10 : i32
    scf.if %20 {
      %24 = tpu.iota {dimensions = array<i32: 1>} : vector<32x128xi32>
      %25 = vector.extract_strided_slice %3 {offsets = [0, 0], sizes = [32, 128], strides = [1, 1]} : vector<32x256xf32> to vector<32x128xf32>
      %c0_i32_12 = arith.constant 0 : i32
      %26 = vector.broadcast %c0_i32_12 : i32 to vector<32x128xi32>
      %27 = arith.cmpi eq, %24, %26 : vector<32x128xi32>
      %cst_13 = arith.constant 1.96078428E-4 : f32
      %cst_14 = arith.constant 0.000000e+00 : f32
      %28 = vector.broadcast %cst_13 : f32 to vector<32x128xf32>
      %29 = vector.broadcast %cst_14 : f32 to vector<32x128xf32>
      %30 = arith.select %27, %28, %29 : vector<32x128xi1>, vector<32x128xf32>
      %31 = arith.mulf %30, %25 : vector<32x128xf32>
      %c0_15 = arith.constant 0 : index
      %c0_16 = arith.constant 0 : index
      %32 = vector.load %arg5[%c0_15, %c0_16] : memref<32x256xf32, #tpu.memory_space<vmem>>, vector<32x128xf32>
      %33 = arith.subf %32, %31 : vector<32x128xf32>
      %c0_17 = arith.constant 0 : index
      %c0_18 = arith.constant 0 : index
      %34 = vector.load %arg5[%c0_17, %c0_18] : memref<32x256xf32, #tpu.memory_space<vmem>>, vector<32x128xf32>
      tpu.vector_store %arg5[%c0_17, %c0_18], %33 {strides = array<i32>} : memref<32x256xf32, #tpu.memory_space<vmem>>, vector<32x128xf32>,
    } else {
    }
    %c1_i32 = arith.constant 1 : i32
    %21 = arith.cmpi eq, %arg1, %c1_i32 : i32
    %22 = arith.extui %21 : i1 to i32
    %c0_i32_11 = arith.constant 0 : i32
    %23 = arith.cmpi ne, %22, %c0_i32_11 : i32
    scf.if %23 {
      %c0_i32_12 = arith.constant 0 : i32
      %24 = vector.broadcast %c0_i32_12 : i32 to vector<32x1xi32>
      %25 = arith.cmpi ne, %4, %24 : vector<32x1xi32>
      %c0_13 = arith.constant 0 : index
      %c0_14 = arith.constant 0 : index
      %26 = vector.load %arg5[%c0_13, %c0_14] : memref<32x256xf32, #tpu.memory_space<vmem>>, vector<32x256xf32>
      %cst_15 = arith.constant dense<0.000000e+00> : vector<32xf32>
      %27 = vector.multi_reduction <add>, %26, %cst_15 [1] : vector<32x256xf32> to vector<32xf32>
      %28 = vector.shape_cast %27 : vector<32xf32> to vector<32x1xf32>
      %cst_16 = arith.constant 0.000000e+00 : f32
      %29 = vector.broadcast %cst_16 : f32 to vector<32x1xf32>
      %30 = arith.select %25, %28, %29 : vector<32x1xi1>, vector<32x1xf32>
      %31 = arith.extui %25 : vector<32x1xi1> to vector<32x1xi32>
      %32 = arith.sitofp %31 : vector<32x1xi32> to vector<32x1xf32>
      %33 = vector.shape_cast %32 : vector<32x1xf32> to vector<1x32x1xf32>
      %cst_17 = arith.constant dense<0.000000e+00> : vector<1xf32>
      %34 = vector.multi_reduction <add>, %33, %cst_17 [1, 2] : vector<1x32x1xf32> to vector<1xf32>
      %35 = vector.shape_cast %34 : vector<1xf32> to vector<1x1x1xf32>
      %36 = vector.extract %35[0, 0, 0] : f32 from vector<1x1x1xf32>
      %cst_18 = arith.constant -0.948524057 : f32
      %37 = arith.mulf %cst_18, %36 : f32
      %38 = vector.shape_cast %30 : vector<32x1xf32> to vector<1x32x1xf32>
      %cst_19 = arith.constant dense<0.000000e+00> : vector<1xf32>
      %39 = vector.multi_reduction <add>, %38, %cst_19 [1, 2] : vector<1x32x1xf32> to vector<1xf32>
      %40 = vector.shape_cast %39 : vector<1xf32> to vector<1x1x1xf32>
      %41 = vector.extract %40[0, 0, 0] : f32 from vector<1x1x1xf32>
      %42 = arith.subf %37, %41 : f32
      %43 = vector.broadcast %42 : f32 to vector<1x8x128xf32>
      %c0_20 = arith.constant 0 : index
      %c0_21 = arith.constant 0 : index
      %c0_22 = arith.constant 0 : index
      %44 = vector.load %arg4[%c0_20, %c0_21, %c0_22] : memref<1x8x128xf32, #tpu.memory_space<vmem>>, vector<1x8x128xf32>
      tpu.vector_store %arg4[%c0_20, %c0_21, %c0_22], %43 {strides = array<i32>} : memref<1x8x128xf32, #tpu.memory_space<vmem>>, vector<1x8x128xf32>,
    } else {
    }
    return
  }
  func.func @transform_0(%arg0: i32, %arg1: i32) -> (i32, i32) {
    %c0_i32 = arith.constant 0 : i32
    return %arg0, %arg1 : i32, i32
  }
  func.func @transform_1(%arg0: i32, %arg1: i32) -> (i32, i32) {
    %c0_i32 = arith.constant 0 : i32
    %c0_i32_0 = arith.constant 0 : i32
    return %arg0, %c0_i32 : i32, i32
  }
  func.func @transform_2(%arg0: i32, %arg1: i32) -> (i32, i32, i32) {
    %c0_i32 = arith.constant 0 : i32
    %c0_i32_0 = arith.constant 0 : i32
    %c0_i32_1 = arith.constant 0 : i32
    return %arg0, %c0_i32, %c0_i32_0 : i32, i32, i32
  }
}

</mosaic_0001>

<llo_original>
// kernel: tpu_custom_call.1
$region0: #{tpu_custom_call.1}
  #allocation0 [shape = 'u32[]', space=smem, size = 0x4, offset = 0x4, fixed_abs, tag = 'smem constant byte address 0x4 - core index']
  #allocation1 [shape = 'u32[144,128]{1,0:T(1,128)}', space=vmem, size = 0x12000, scoped, tag = 'internal scratch']
  #allocation2 [shape = 'f32[32,256]{1,0:T(8,128)}', space=vmem, size = 0x8000, scoped, tag = 'scratch operand']
  %s0 = inlined_call_operand.hbm [shape: f32[64,512], index: 0, kind: input, shape index: {}]
  %s1 = inlined_call_operand.vmem [shape: s32[64,1], index: 1, kind: input, shape index: {}]
  %s2 = inlined_call_operand.hbm [shape: f32[2,8,128], index: 2, kind: output, shape index: {}]
  %s3 = sld [smem:[#allocation0]]
  $region57: #{tpu_custom_call.1} parent=0
    _
  %s5 = ssub.s32 1, %s3
  %s6 = scalar_select 0, %s5, %s3
  $region1: #{tpu_custom_call.1} parent=0
    #allocation3 [shape = 'u8[65536]{0}', space=vmem, size = 0x10000, scoped, tag = 'input window, operand 0']
    #allocation4 [shape = 's32[2]{0}', space=sflag, size = 0x8, scoped, tag = 'scoped memory for tpu_custom_call.1']
    #allocation5 [shape = 's32[2]{0}', space=sflag, size = 0x8, scoped, tag = 'scoped memory for tpu_custom_call.1']
    #allocation6 [shape = 'u8[8192]{0}', space=vmem, size = 0x2000, scoped, tag = 'output window, operand 0']
    %7 = vsyncpa [#allocation4], 0
    %s8 = scalar_lea.sflag [#allocation4], 1
    %9 = vsyncpa %s8, 0
    %10 = vsyncpa [#allocation5], 0
    %s11 = scalar_lea.sflag [#allocation5], 1
    %12 = vsyncpa %s11, 0
    loop: start=0, step=1, limit=6
    $region2: #{tpu_custom_call.1} parent=1 // loop_pre_header
      _
    $region3: #{tpu_custom_call.1} parent=1 // loop_header
      %s14 = sphi 0, %s18
      %p15 = scmp.ge.s32.totalorder %s14, 6
      %s21 = sphi 0, %s33
      %s22 = sphi 0, %s29
      %s23 = sphi 0, %s21
      %s24 = sphi 0, %s22
      %s25 = sphi 0, %s23
      %s26 = sphi 0, %s24
      %s38 = sphi 0, %s40
      %s41 = sphi 0, %s38
      %s42 = sphi 0, %s41
      %s58 = sphi 0, %s42
      %s64 = sphi 0, %s66
      %s67 = sphi 0, %s64
      %s68 = sphi 0, %s67
      %s84 = sphi 0, %s68
      %s90 = sphi 0, %s92
      %s93 = sphi 0, %s90
      %s94 = sphi 0, %s93
      %s110 = sphi 0, %s94
    $region4: #{tpu_custom_call.1} parent=1 // loop_header_branch
      %17 = sbr.rel (%p15) target = $region8
    $region5: #{tpu_custom_call.1} parent=1 // loop_body
      %s19 = ssub.s32 %s14, 1
      %s20 = ssub.s32 %s14, 2
      %s27 = sadd.s32 1, %s22
      %p28 = scmp.ge.s32.totalorder %s27, 2
      %s29 = scalar_select %p28, 0, %s27
      %s30 = sadd.s32 1, %s21
      %s31 = scalar_select %p28, %s30, %s21
      %p32 = scmp.ge.s32.totalorder %s31, 2
      %s33 = scalar_select %p32, 0, %s31
      %s34 = ssub.s32 %s21, %s33
      %s35 = ssub.s32 %s22, %s29
      %s36 = sor.u32 %s34, %s35
      %p37 = scmp.eq.s32.totalorder %s36, 0
      %s39 = sadd.s32 %s38, 1
      %s40 = scalar_select %p37, %s38, %s39
      %p43 = pneg %p37
      %p44 = scmp.eq.s32.totalorder %s14, 3
      %p45 = por %p43, %p44
      %p46 = scmp.ne.s32.totalorder %s38, %s41
      %p47 = scmp.eq.s32.totalorder %s14, 0
      %p48 = por %p46, %p47
      %p49 = scmp.ne.s32.totalorder %s38, %s41
      %p50 = scmp.eq.s32.totalorder %s19, 3
      %p51 = por %p49, %p50
      %p52 = scmp.ne.s32.totalorder %s41, %s42
      %p53 = scmp.eq.s32.totalorder %s19, 0
      %p54 = por %p52, %p53
      %p55 = scmp.ne.s32.totalorder %s41, %s42
      %p56 = scmp.eq.s32.totalorder %s20, 3
      %p57 = por %p55, %p56
      %p59 = scmp.ne.s32.totalorder %s42, %s58
      %p60 = scmp.eq.s32.totalorder %s20, 0
      %p61 = por %p59, %p60
      %s62 = ssub.s32 %s21, %s33
      %p63 = scmp.eq.s32.totalorder %s62, 0
      %s65 = sadd.s32 %s64, 1
      %s66 = scalar_select %p63, %s64, %s65
      %p69 = pneg %p63
      %p70 = scmp.eq.s32.totalorder %s14, 3
      %p71 = por %p69, %p70
      %p72 = scmp.ne.s32.totalorder %s64, %s67
      %p73 = scmp.eq.s32.totalorder %s14, 0
      %p74 = por %p72, %p73
      %p75 = scmp.ne.s32.totalorder %s64, %s67
      %p76 = scmp.eq.s32.totalorder %s19, 3
      %p77 = por %p75, %p76
      %p78 = scmp.ne.s32.totalorder %s67, %s68
      %p79 = scmp.eq.s32.totalorder %s19, 0
      %p80 = por %p78, %p79
      %p81 = scmp.ne.s32.totalorder %s67, %s68
      %p82 = scmp.eq.s32.totalorder %s20, 3
      %p83 = por %p81, %p82
      %p85 = scmp.ne.s32.totalorder %s68, %s84
      %p86 = scmp.eq.s32.totalorder %s20, 0
      %p87 = por %p85, %p86
      %s88 = ssub.s32 %s21, %s33
      %p89 = scmp.eq.s32.totalorder %s88, 0
      %s91 = sadd.s32 %s90, 1
      %s92 = scalar_select %p89, %s90, %s91
      %p95 = pneg %p89
      %p96 = scmp.eq.s32.totalorder %s14, 3
      %p97 = por %p95, %p96
      %p98 = scmp.ne.s32.totalorder %s90, %s93
      %p99 = scmp.eq.s32.totalorder %s14, 0
      %p100 = por %p98, %p99
      %p101 = scmp.ne.s32.totalorder %s90, %s93
      %p102 = scmp.eq.s32.totalorder %s19, 3
      %p103 = por %p101, %p102
      %p104 = scmp.ne.s32.totalorder %s93, %s94
      %p105 = scmp.eq.s32.totalorder %s19, 0
      %p106 = por %p104, %p105
      %p107 = scmp.ne.s32.totalorder %s93, %s94
      %p108 = scmp.eq.s32.totalorder %s20, 3
      %p109 = por %p107, %p108
      %p111 = scmp.ne.s32.totalorder %s94, %s110
      %p112 = scmp.eq.s32.totalorder %s20, 0
      %p113 = por %p111, %p112
      %p114 = scmp.le.s32.totalorder 1, %s14
      %p115 = scmp.lt.s32.totalorder %s14, 5
      %p116 = pnand %p114, %p115
      %p117 = pneg %p116
      // Predicated region
      $region9: #{tpu_custom_call.1} parent=5 // pred_check
        _
      $region10: #{tpu_custom_call.1} parent=5 // pred_check_branch
        %119 = sbr.rel (%p116) target = $region12
      $region11: #{tpu_custom_call.1} parent=5 // pred_region
        %s120 = ssub.s32 %s14, 1
      $region12: #{tpu_custom_call.1} parent=5 // pred_fallthru
        _
      %p121 = scmp.lt.s32.totalorder %s14, 4
      // Predicated region
      $region13: #{tpu_custom_call.1} parent=5 // pred_check
        %p122 = pneg %p121
      $region14: #{tpu_custom_call.1} parent=5 // pred_check_branch
        %124 = sbr.rel (%p122) target = $region16
      $region15: #{tpu_custom_call.1} parent=5 // pred_region
        // Predicated region
        $region17: #{tpu_custom_call.1} parent=15 // pred_check
          %p125 = pneg %p48
        $region18: #{tpu_custom_call.1} parent=15 // pred_check_branch
          %127 = sbr.rel (%p125) target = $region20
        $region19: #{tpu_custom_call.1} parent=15 // pred_region
          %s128 = sand.u32 %s38, 1
          %s129 = scalar_lea.sflag [#allocation4], %s128
          %s130 = sand.u32 %s38, 1
          %s131 = smul.addr %s130, 64
          %s132 = scalar_lea.vmem [#allocation3], %s131
          %s133 = smul.u32 4, %s21
          %s134 = smul.u32 2, %s22
          %s136 = ssub.s32 1024, 1024
          %137 = vsyncadd %s129, %s136
          %s138 = smul.addr %s133, 4
          %s139 = sadd.s32 %s134, %s138
          %s140 = smul.addr %s139, 128
          %s141 = scalar_lea.hbm %s0, %s140
          %s142 = sshll.u32 %s132, 4
          %s143 = int_to_ptr.vmem [resolvable:$true] %s142
          %148 = dma.hbm_to_vmem [thread:$0]  %s141, 1024, %s143, %s129, 512, 256, 16
        $region20: #{tpu_custom_call.1} parent=15 // pred_fallthru
          _
        // Predicated region
        $region21: #{tpu_custom_call.1} parent=15 // pred_check
          %p149 = pneg %p74
        $region22: #{tpu_custom_call.1} parent=15 // pred_check_branch
          %151 = sbr.rel (%p149) target = $region24
        $region23: #{tpu_custom_call.1} parent=15 // pred_region
          %s152 = smul.u32 4, %s21
          %p153 = scmp.lt.s32.totalorder %s152, 7
          %s154 = scalar_select %p153, %s152, 7
          %s155 = smul.addr %s154, 8
          %s156 = scalar_lea.vmem %s1, %s155
          %s157 = smul.u32 4, %s21
        $region24: #{tpu_custom_call.1} parent=15 // pred_fallthru
          _
      $region16: #{tpu_custom_call.1} parent=5 // pred_fallthru
        _
      %p158 = scmp.le.s32.totalorder 1, %s14
      %p159 = scmp.lt.s32.totalorder %s14, 5
      %p160 = pnand %p158, %p159
      %p161 = pneg %p160
      // Predicated region
      $region25: #{tpu_custom_call.1} parent=5 // pred_check
        _
      $region26: #{tpu_custom_call.1} parent=5 // pred_check_branch
        %163 = sbr.rel (%p160) target = $region28
      $region27: #{tpu_custom_call.1} parent=5 // pred_region
        %s164 = ssub.s32 %s14, 1
        %s165 = sand.u32 %s41, 1
        %s166 = scalar_lea.sflag [#allocation4], %s165
        %s167 = sand.u32 %s41, 1
        %s168 = smul.addr %s167, 64
        %s169 = scalar_lea.vmem [#allocation3], %s168
        // Predicated region
        $region29: #{tpu_custom_call.1} parent=27 // pred_check
          %p170 = pneg %p54
        $region30: #{tpu_custom_call.1} parent=27 // pred_check_branch
          %172 = sbr.rel (%p170) target = $region32
        $region31: #{tpu_custom_call.1} parent=27 // pred_region
          %173 = dma.done %s166, 1024
        $region32: #{tpu_custom_call.1} parent=27 // pred_fallthru
          _
        %s174 = sand.u32 %s41, 1
        %s175 = scalar_lea.sflag [#allocation4], %s174
        %s176 = sand.u32 %s41, 1
        %s177 = smul.addr %s176, 64
        %s178 = scalar_lea.vmem [#allocation3], %s177
        %p179 = pneg %p54
        %p180 = pneg %p51
        %s181 = smul.u32 4, %s23
        %p182 = scmp.lt.s32.totalorder %s181, 7
        %s183 = scalar_select %p182, %s181, 7
        %s184 = smul.addr %s183, 8
        %s185 = scalar_lea.vmem %s1, %s184
        %p186 = pneg %p80
        %p187 = pneg %p77
        %p188 = pneg %p106
        %p189 = pneg %p103
        %s190 = sand.u32 %s93, 1
        %s191 = scalar_lea.sflag [#allocation5], %s190
        %s192 = sand.u32 %s93, 1
        %s193 = smul.addr %s192, 8
        %s194 = scalar_lea.vmem [#allocation6], %s193
        %s195 = smul.u32 4, %s23
        %s196 = smul.u32 2, %s24
        %s197 = smul.u32 4, %s23
        %p198 = scmp.lt.s32.totalorder %s197, 7
        %s199 = scalar_select %p198, %s197, 7
        %s200 = smul.addr %s199, 8
        %s201 = scalar_lea.vmem %s1, %s200
        %s202 = smul.u32 4, %s23
        %p203 = scmp.eq.s32.totalorder %s24, 0
        // Predicated region
        $region33: #{tpu_custom_call.1} parent=27 // pred_check
          %p204 = pneg %p203
        $region34: #{tpu_custom_call.1} parent=27 // pred_check_branch
          %206 = sbr.rel (%p204) target = $region36
        $region35: #{tpu_custom_call.1} parent=27 // pred_region
          %207 = vst [vmem:[#allocation2] sm:$0xff] 0.0
          %208 = vst [vmem:[#allocation2 + $0x8] sm:$0xff] 0.0
          %209 = vst [vmem:[#allocation2 + $0x10] sm:$0xff] 0.0
          %210 = vst [vmem:[#allocation2 + $0x18] sm:$0xff] 0.0
          %211 = vst [vmem:[#allocation2 + $0x20] sm:$0xff] 0.0
          %212 = vst [vmem:[#allocation2 + $0x28] sm:$0xff] 0.0
          %213 = vst [vmem:[#allocation2 + $0x30] sm:$0xff] 0.0
          %214 = vst [vmem:[#allocation2 + $0x38] sm:$0xff] 0.0
        $region36: #{tpu_custom_call.1} parent=27 // pred_fallthru
          _
        %v215 = vld [vmem:[%s169] sm:$0xff]
        %v216 = vld [vmem:[%s169 + $0x8] sm:$0xff]
        %v217 = vld [vmem:[%s169 + $0x10] sm:$0xff]
        %v218 = vld [vmem:[%s169 + $0x18] sm:$0xff]
        %v219 = vld [vmem:[%s169 + $0x20] sm:$0xff]
        %v220 = vld [vmem:[%s169 + $0x28] sm:$0xff]
        %v221 = vld [vmem:[%s169 + $0x30] sm:$0xff]
        %v222 = vld [vmem:[%s169 + $0x38] sm:$0xff]
        %v223 = vld [vmem:[%s201] sm:$0xff]
        %v224 = vld [vmem:[%s201 + $0x8] sm:$0xff]
        %v225 = vld [vmem:[%s201 + $0x10] sm:$0xff]
        %v226 = vld [vmem:[%s201 + $0x18] sm:$0xff]
        %v227 = vlaneseq
        %v228 = vand.u32 %v227, 127
        %v229 = vadd.s32 %v228, 128
        %s230 = smul.u32 %s24, 256
        %v231 = vstv %s230
        %v232 = vsub.s32 %v223, %v231
        %v233 = vsub.s32 %v224, %v231
        %v234 = vsub.s32 %v225, %v231
        %v235 = vsub.s32 %v226, %v231
        %236 = vset.pattern.permute.xlu0 0
        %237 = vperm.xlu0 %236, %v232
        %v238 = vpop.permute.xlu0 %237
        %239 = vset.pattern.permute.xlu0 0
        %240 = vperm.xlu0 %239, %v233
        %v241 = vpop.permute.xlu0 %240
        %242 = vset.pattern.permute.xlu0 0
        %243 = vperm.xlu0 %242, %v234
        %v244 = vpop.permute.xlu0 %243
        %245 = vset.pattern.permute.xlu0 0
        %246 = vperm.xlu0 %245, %v235
        %v247 = vpop.permute.xlu0 %246
        %vm248 = vcmp.eq.s32.totalorder %v228, %v238
        %vm249 = vcmp.eq.s32.totalorder %v229, %v238
        %vm250 = vcmp.eq.s32.totalorder %v228, %v241
        %vm251 = vcmp.eq.s32.totalorder %v229, %v241
        %vm252 = vcmp.eq.s32.totalorder %v228, %v244
        %vm253 = vcmp.eq.s32.totalorder %v229, %v244
        %vm254 = vcmp.eq.s32.totalorder %v228, %v247
        %vm255 = vcmp.eq.s32.totalorder %v229, %v247
        %v256 = vsel %vm248, 0.9, 0.00019607843
        %v257 = vsel %vm249, 0.9, 0.00019607843
        %v258 = vsel %vm250, 0.9, 0.00019607843
        %v259 = vsel %vm251, 0.9, 0.00019607843
        %v260 = vsel %vm252, 0.9, 0.00019607843
        %v261 = vsel %vm253, 0.9, 0.00019607843
        %v262 = vsel %vm254, 0.9, 0.00019607843
        %v263 = vsel %vm255, 0.9, 0.00019607843
        %v264 = vld [vmem:[#allocation2] sm:$0xff]
        %v265 = vld [vmem:[#allocation2 + $0x8] sm:$0xff]
        %v266 = vld [vmem:[#allocation2 + $0x10] sm:$0xff]
        %v267 = vld [vmem:[#allocation2 + $0x18] sm:$0xff]
        %v268 = vld [vmem:[#allocation2 + $0x20] sm:$0xff]
        %v269 = vld [vmem:[#allocation2 + $0x28] sm:$0xff]
        %v270 = vld [vmem:[#allocation2 + $0x30] sm:$0xff]
        %v271 = vld [vmem:[#allocation2 + $0x38] sm:$0xff]
        %v272 = vmul.f32 %v256, %v215
        %v273 = vmul.f32 %v257, %v216
        %v274 = vmul.f32 %v258, %v217
        %v275 = vmul.f32 %v259, %v218
        %v276 = vmul.f32 %v260, %v219
        %v277 = vmul.f32 %v261, %v220
        %v278 = vmul.f32 %v262, %v221
        %v279 = vmul.f32 %v263, %v222
        %v280 = vadd.f32 %v264, %v272
        %v281 = vadd.f32 %v265, %v273
        %v282 = vadd.f32 %v266, %v274
        %v283 = vadd.f32 %v267, %v275
        %v284 = vadd.f32 %v268, %v276
        %v285 = vadd.f32 %v269, %v277
        %v286 = vadd.f32 %v270, %v278
        %v287 = vadd.f32 %v271, %v279
        %288 = vst [vmem:[#allocation2] sm:$0xff] %v280
        %289 = vst [vmem:[#allocation2 + $0x8] sm:$0xff] %v281
        %290 = vst [vmem:[#allocation2 + $0x10] sm:$0xff] %v282
        %291 = vst [vmem:[#allocation2 + $0x18] sm:$0xff] %v283
        %292 = vst [vmem:[#allocation2 + $0x20] sm:$0xff] %v284
        %293 = vst [vmem:[#allocation2 + $0x28] sm:$0xff] %v285
        %294 = vst [vmem:[#allocation2 + $0x30] sm:$0xff] %v286
        %295 = vst [vmem:[#allocation2 + $0x38] sm:$0xff] %v287
        // Predicated region
        $region37: #{tpu_custom_call.1} parent=27 // pred_check
          %p296 = pneg %p203
        $region38: #{tpu_custom_call.1} parent=27 // pred_check_branch
          %298 = sbr.rel (%p296) target = $region40
        $region39: #{tpu_custom_call.1} parent=27 // pred_region
          %vm299 = vcmp.eq.s32.totalorder %v228, 0
          %v300 = vsel %vm299, 0.00019607843, 0.0
          %v301 = vmul.f32 %v300, %v215
          %v302 = vmul.f32 %v300, %v217
          %v303 = vmul.f32 %v300, %v219
          %v304 = vmul.f32 %v300, %v221
          %v305 = vld [vmem:[#allocation2] sm:$0xff]
          %v306 = vld [vmem:[#allocation2 + $0x10] sm:$0xff]
          %v307 = vld [vmem:[#allocation2 + $0x20] sm:$0xff]
          %v308 = vld [vmem:[#allocation2 + $0x30] sm:$0xff]
          %v309 = vsub.f32 %v305, %v301
          %v310 = vsub.f32 %v306, %v302
          %v311 = vsub.f32 %v307, %v303
          %v312 = vsub.f32 %v308, %v304
          %313 = vst [vmem:[#allocation2] sm:$0xff] %v309
          %314 = vst [vmem:[#allocation2 + $0x10] sm:$0xff] %v310
          %315 = vst [vmem:[#allocation2 + $0x20] sm:$0xff] %v311
          %316 = vst [vmem:[#allocation2 + $0x30] sm:$0xff] %v312
        $region40: #{tpu_custom_call.1} parent=27 // pred_fallthru
          _
        %p317 = scmp.eq.s32.totalorder %s24, 1
        // Predicated region
        $region41: #{tpu_custom_call.1} parent=27 // pred_check
          %p318 = pneg %p317
        $region42: #{tpu_custom_call.1} parent=27 // pred_check_branch
          %320 = sbr.rel (%p318) target = $region44
        $region43: #{tpu_custom_call.1} parent=27 // pred_region
          %vm321 = vcmp.ne.s32.totalorder %v223, 0
          %vm322 = vcmp.ne.s32.totalorder %v224, 0
          %vm323 = vcmp.ne.s32.totalorder %v225, 0
          %vm324 = vcmp.ne.s32.totalorder %v226, 0
          %v325 = vld [vmem:[#allocation2] sm:$0xff]
          %v326 = vld [vmem:[#allocation2 + $0x8] sm:$0xff]
          %v327 = vld [vmem:[#allocation2 + $0x10] sm:$0xff]
          %v328 = vld [vmem:[#allocation2 + $0x18] sm:$0xff]
          %v329 = vld [vmem:[#allocation2 + $0x20] sm:$0xff]
          %v330 = vld [vmem:[#allocation2 + $0x28] sm:$0xff]
          %v331 = vld [vmem:[#allocation2 + $0x30] sm:$0xff]
          %v332 = vld [vmem:[#allocation2 + $0x38] sm:$0xff]
          %v333 = vadd.f32 %v325, %v326
          %334 = vadd.xlane.f32.xlu0 %v333
          %v335 = vpop.xlane.xlu0 %334
          %v336 = vadd.f32 %v327, %v328
          %337 = vadd.xlane.f32.xlu0 %v336
          %v338 = vpop.xlane.xlu0 %337
          %v339 = vadd.f32 %v329, %v330
          %340 = vadd.xlane.f32.xlu0 %v339
          %v341 = vpop.xlane.xlu0 %340
          %v342 = vadd.f32 %v331, %v332
          %343 = vadd.xlane.f32.xlu0 %v342
          %v344 = vpop.xlane.xlu0 %343
          %v345 = vsel %vm321, %v335, 0.0
          %v346 = vsel %vm322, %v338, 0.0
          %v347 = vsel %vm323, %v341, 0.0
          %v348 = vsel %vm324, %v344, 0.0
          %v349 = vsel %vm321, 1, 0
          %v350 = vsel %vm322, 1, 0
          %v351 = vsel %vm323, 1, 0
          %v352 = vsel %vm324, 1, 0
          %v353 = vcvt.s32.f32 %v349
          %v354 = vcvt.s32.f32 %v350
          %v355 = vcvt.s32.f32 %v351
          %v356 = vcvt.s32.f32 %v352
          %vm357 = vcmask 7168
          %v358 = vsel %vm357, %v353, 0.0
          %v359 = vsel %vm357, %v354, 0.0
          %v360 = vadd.f32 %v358, %v359
          %v361 = vsel %vm357, %v355, 0.0
          %v362 = vadd.f32 %v360, %v361
          %v363 = vsel %vm357, %v356, 0.0
          %v364 = vadd.f32 %v362, %v363
          %365 = vadd.xlane.f32.xlu0 %v364
          %v366 = vpop.xlane.xlu0 %365
          %v367 = vrot.slane %v366, 4
          %v368 = vadd.f32 %v366, %v367
          %v369 = vrot.slane %v368, 2
          %v370 = vadd.f32 %v368, %v369
          %v371 = vrot.slane %v370, 1
          %v372 = vadd.f32 %v370, %v371
          %s373 = vtos %v372
          %s374 = smul.f32 %s373, -0.94852406
          %v375 = vsel %vm357, %v345, 0.0
          %v376 = vsel %vm357, %v346, 0.0
          %v377 = vadd.f32 %v375, %v376
          %v378 = vsel %vm357, %v347, 0.0
          %v379 = vadd.f32 %v377, %v378
          %v380 = vsel %vm357, %v348, 0.0
          %v381 = vadd.f32 %v379, %v380
          %382 = vadd.xlane.f32.xlu0 %v381
          %v383 = vpop.xlane.xlu0 %382
          %v384 = vrot.slane %v383, 4
          %v385 = vadd.f32 %v383, %v384
          %v386 = vrot.slane %v385, 2
          %v387 = vadd.f32 %v385, %v386
          %v388 = vrot.slane %v387, 1
          %v389 = vadd.f32 %v387, %v388
          %s390 = vtos %v389
          %s391 = ssub.f32 %s374, %s390
          %v392 = vstv %s391
          %393 = vst [vmem:[%s194] sm:$0xff] %v392
        $region44: #{tpu_custom_call.1} parent=27 // pred_fallthru
          _
        %s394 = sand.u32 %s93, 1
        %s395 = scalar_lea.sflag [#allocation5], %s394
        %s396 = sand.u32 %s93, 1
        %s397 = smul.addr %s396, 8
        %s398 = scalar_lea.vmem [#allocation6], %s397
        // Predicated region
        $region45: #{tpu_custom_call.1} parent=27 // pred_check
          %p399 = pneg %p103
        $region46: #{tpu_custom_call.1} parent=27 // pred_check_branch
          %401 = sbr.rel (%p399) target = $region48
        $region47: #{tpu_custom_call.1} parent=27 // pred_region
          %s403 = ssub.s32 128, 128
          %404 = vsyncadd %s395, %s403
          %s405 = smul.addr %s23, 128
          %s406 = scalar_lea.hbm %s2, %s405
          %s408 = sshll.u32 %s398, 4
          %s409 = int_to_ptr.vmem [resolvable:$true] %s408
          %411 = dma.vmem_to_hbm [thread:$0]  %s409, 128, %s406, %s395
        $region48: #{tpu_custom_call.1} parent=27 // pred_fallthru
          _
      $region28: #{tpu_custom_call.1} parent=5 // pred_fallthru
        _
      %p412 = scmp.le.s32.totalorder 2, %s14
      // Predicated region
      $region49: #{tpu_custom_call.1} parent=5 // pred_check
        %p413 = pneg %p412
      $region50: #{tpu_custom_call.1} parent=5 // pred_check_branch
        %415 = sbr.rel (%p413) target = $region52
      $region51: #{tpu_custom_call.1} parent=5 // pred_region
        %s416 = ssub.s32 %s14, 2
        // Predicated region
        $region53: #{tpu_custom_call.1} parent=51 // pred_check
          %p417 = pneg %p109
        $region54: #{tpu_custom_call.1} parent=51 // pred_check_branch
          %419 = sbr.rel (%p417) target = $region56
        $region55: #{tpu_custom_call.1} parent=51 // pred_region
          %s420 = sand.u32 %s94, 1
          %s421 = scalar_lea.sflag [#allocation5], %s420
          %s422 = sand.u32 %s94, 1
          %s423 = smul.addr %s422, 8
          %s424 = scalar_lea.vmem [#allocation6], %s423
          %425 = dma.done %s421, 128
        $region56: #{tpu_custom_call.1} parent=51 // pred_fallthru
          _
      $region52: #{tpu_custom_call.1} parent=5 // pred_fallthru
        _
    $region6: #{tpu_custom_call.1} parent=1 // loop_footer
      %s18 = sadd.s32 1, %s14
    $region7: #{tpu_custom_call.1} parent=1 // loop_footer_branch
      %13 = sbr.rel target = $region3
    $region8: #{tpu_custom_call.1} parent=1 // loop_exit
      _
    %426 = vsyncpa [#allocation4], 1
    %s427 = scalar_lea.sflag [#allocation4], 1
    %428 = vsyncpa %s427, 1
    %429 = vsyncpa [#allocation5], 1
    %s430 = scalar_lea.sflag [#allocation5], 1
    %431 = vsyncpa %s430, 1

</llo_original>
